<compile_context>
chip_gen: v5e
topology: v5e:2x2
jax: 0.10.0
libtpu: 0.0.40
codegen_flags: <defaults>
</compile_context>

<pallas_src>
import functools

import jax
import jax.numpy as jnp
from jax.experimental import pallas as pl
from jax.experimental.pallas import tpu as pltpu

ALPHA = 0.5   # FocalLoss.__init__ default -> alpha table [alpha, 1 - alpha]
GAMMA = 2     # FocalLoss.__init__ default
LANES = 128


def _round_up(x, m):
    return (x + m - 1) // m * m


def focal_loss_kernel(x_ref, t_ref, out_ref, *, alpha, gamma, block_rows,
                      steps_per_core, last_tile, valid_in_last,
                      may_have_ghosts):
    c = pl.program_id(0)
    i = pl.program_id(1)
    tile = c * steps_per_core + i

    @pl.when(i == 0)
    def _():
        out_ref[...] = jnp.zeros_like(out_ref)

    def tile_loss(elem_mask):
        x = x_ref[...].astype(jnp.float32)
        t = t_ref[...].astype(jnp.float32)
        if elem_mask is not None:
            # Neutralize padded / stale partial-block elements *before* the
            # transcendentals so garbage (possibly NaN/inf) never propagates.
            x = jnp.where(elem_mask, x, 0.0)
            t = jnp.where(elem_mask, t, 0.0)

        # For binary t: s = x*(1-2t)  ->  BCEWithLogits loss = softplus(s),
        # pt = exp(-loss) = sigmoid(-s), hence 1-pt = sigmoid(s).
        s = x * (1.0 - 2.0 * t)
        e = jnp.exp(-jnp.abs(s))                       # EUP transcendental #1
        loss = jnp.maximum(s, 0.0) + jnp.log1p(e)      # EUP transcendental #2

        denom = 1.0 + e
        inv = pl.reciprocal(denom, approx=True)        # EUP slot, not VALU
        inv = inv * (2.0 - denom * inv)                # 1 Newton step -> ~f32 exact
        one_minus_pt = jnp.where(s >= 0.0, 1.0, e) * inv

        # at = [alpha, 1-alpha].gather(0, targets)  (exact for binary targets)
        at = alpha + (1.0 - 2.0 * alpha) * t

        if float(gamma) == int(gamma):                 # integer power -> VPU muls
            mod = one_minus_pt ** int(gamma)
        else:                                          # general float gamma
            mod = one_minus_pt ** gamma
        f = at * mod * loss
        if elem_mask is not None:
            f = jnp.where(elem_mask, f, 0.0)
        return f

    def accumulate(f):
        # Fold the (block_rows, 128) tile into the resident (8, 128) f32
        # accumulator.  First stage adds 4-vreg-wide (32, 128) slabs so all 4
        # VALU slots stay busy instead of one long serial (8,128) add chain.
        if block_rows % 32 == 0:
            p = jnp.sum(f.reshape(block_rows // 32, 32, LANES), axis=0)
            out_ref[...] += jnp.sum(p.reshape(4, 8, LANES), axis=0)
        elif block_rows % 8 == 0:
            out_ref[...] += jnp.sum(f.reshape(block_rows // 8, 8, LANES), axis=0)
        else:
            # Tiny single-block case (n % 128 == 0 but rows % 8 != 0):
            # plain sublane reduction into row 0.
            out_ref[0:1, :] += jnp.sum(f, axis=0, keepdims=True)

    need_mask = valid_in_last < block_rows * LANES

    if need_mask:
        @pl.when(tile < last_tile)
        def _():
            accumulate(tile_loss(None))

        @pl.when(tile == last_tile)
        def _():
            # Tile-local indices only -> no int32 overflow for any n.
            row = jax.lax.broadcasted_iota(jnp.int32, (block_rows, LANES), 0)
            lane = jax.lax.broadcasted_iota(jnp.int32, (block_rows, LANES), 1)
            mask = row * LANES + lane < valid_in_last
            accumulate(tile_loss(mask))
    elif may_have_ghosts:
        # Grid slots past the last real tile (only when num_cores does not
        # divide the tile count): DMA is clamped in the index_map, skip here.
        @pl.when(tile <= last_tile)
        def _():
            accumulate(tile_loss(None))
    else:
        accumulate(tile_loss(None))


def focal_loss(inputs, targets, alpha=ALPHA, gamma=GAMMA, *,
               block_rows=4096, num_cores=1):
    """Mean focal loss over flattened binary logits/labels of any length.

    block_rows=4096 (2 MiB/input/buffer) fits every chip's default scoped
    VMEM; bump to 8192 on v6e/v7x for large N.  num_cores=2 splits the row
    stream across v7x's two TensorCores; leave at 1 on v5e/v6e.
    """
    x = inputs.reshape(-1)
    t = targets.reshape(-1)
    n = x.size

    if n % LANES == 0:
        # Zero-copy: reshape of a contiguous flat array is a bitcast.
        rows = n // LANES
    else:
        # Copy is unavoidable here; pad only to the next 1024-multiple and
        # keep rows a multiple of 8 so the accumulator fold stays aligned.
        rows = _round_up(pl.cdiv(n, LANES), 8)
        pad = rows * LANES - n
        x = jnp.pad(x, (0, pad))
        t = jnp.pad(t, (0, pad))
    x2 = x.reshape(rows, LANES)
    t2 = t.reshape(rows, LANES)

    block_rows = int(block_rows)
    if block_rows >= rows:
        block_rows = rows                       # single full-extent block
    else:
        # Multiple of 32 rows: sublane-aligned for f32/bf16/int8 tiles.
        block_rows = max(32, (block_rows // 32) * 32)

    tiles = pl.cdiv(rows, block_rows)
    num_cores = max(1, min(int(num_cores), tiles))
    steps_per_core = pl.cdiv(tiles, num_cores)
    last_tile = tiles - 1
    valid_in_last = int(n - last_tile * block_rows * LANES)
    may_have_ghosts = num_cores * steps_per_core > tiles

    kernel = functools.partial(
        focal_loss_kernel, alpha=float(alpha), gamma=gamma,
        block_rows=block_rows, steps_per_core=steps_per_core,
        last_tile=last_tile, valid_in_last=valid_in_last,
        may_have_ghosts=may_have_ghosts)

    if may_have_ghosts:
        in_map = lambda c, i: (jnp.minimum(c * steps_per_core + i, last_tile), 0)
    else:
        in_map = lambda c, i: (c * steps_per_core + i, 0)

    out_bytes = num_cores * 8 * LANES * 4
    cost = pl.CostEstimate(
        flops=24 * rows * LANES,
        transcendentals=2 * rows * LANES,
        bytes_accessed=x2.size * x2.dtype.itemsize
                       + t2.size * t2.dtype.itemsize + out_bytes)

    partials = pl.pallas_call(
        kernel,
        out_shape=jax.ShapeDtypeStruct((num_cores * 8, LANES), jnp.float32),
        grid_spec=pltpu.PrefetchScalarGridSpec(
            num_scalar_prefetch=0,
            grid=(num_cores, steps_per_core),
            in_specs=[
                pl.BlockSpec((block_rows, LANES), in_map),
                pl.BlockSpec((block_rows, LANES), in_map),
            ],
            out_specs=pl.BlockSpec((8, LANES), lambda c, i: (c, 0)),
        ),
        compiler_params=pltpu.CompilerParams(
            dimension_semantics=("parallel", "arbitrary"),
            vmem_limit_bytes=32 * 1024 * 1024),
        cost_estimate=cost,
    )(x2, t2)

    # Tiny final cross-lane reduction + mean in plain JAX.
    return jnp.sum(partials) / n


def focal_loss_ref(inputs, targets, alpha=ALPHA, gamma=GAMMA):
    x = inputs.reshape(-1).astype(jnp.float32)
    t = targets.reshape(-1).astype(jnp.float32)
    loss = jnp.maximum(x, 0.0) - x * t + jnp.log1p(jnp.exp(-jnp.abs(x)))
    at = jnp.where(t.astype(jnp.int32) == 1, 1.0 - alpha, alpha)
    pt = jnp.exp(-loss)
    return jnp.mean(at * (1.0 - pt) ** gamma * loss)


if __name__ == "__main__":
    key = jax.random.PRNGKey(0)
    k1, k2 = jax.random.split(key)

    # Module-style multi-label batch: (batch=40, n_labels=125) -> n = 5000.
    logits = jax.random.normal(k1, (40, 125), dtype=jnp.float32)
    labels = jax.random.bernoulli(k2, 0.5, (40, 125)).astype(jnp.float32)
    ref = focal_loss_ref(logits, labels)

    # 1) Defaults: single full-extent (40,128) block, masked lane tail.
    out = jax.block_until_ready(focal_loss(logits, labels))
    assert jnp.allclose(out, ref, rtol=1e-5, atol=1e-6), (out, ref)

    # 2) Multi-step streaming: (32,128) blocks, partial + masked last tile.
    out = jax.block_until_ready(focal_loss(logits, labels, block_rows=32))
    assert jnp.allclose(out, ref, rtol=1e-5, atol=1e-6), (out, ref)

    # 3) 128-aligned, rows % 8 != 0 -> zero-copy view, odd-row fold fallback.
    lg3 = jax.random.normal(k1, (3, 128), dtype=jnp.float32)
    lb3 = jax.random.bernoulli(k2, 0.5, (3, 128)).astype(jnp.float32)
    out3 = jax.block_until_ready(focal_loss(lg3, lb3))
    ref3 = focal_loss_ref(lg3, lb3)
    assert jnp.allclose(out3, ref3, rtol=1e-5, atol=1e-6), (out3, ref3)

    # 4) Larger aligned case with a 2-way core split (5 tiles / 2 cores ->
    #    exercises the clamped "ghost" grid step).
    lg4 = jax.random.normal(k1, (32, 640), dtype=jnp.float32)
    lb4 = jax.random.bernoulli(k2, 0.5, (32, 640)).astype(jnp.float32)
    out4 = jax.block_until_ready(
        focal_loss(lg4, lb4, block_rows=32, num_cores=2))
    ref4 = focal_loss_ref(lg4, lb4)
    assert jnp.allclose(out4, ref4, rtol=1e-5, atol=1e-6), (out4, ref4)

    # 5) Reduced-HBM dtypes: bf16 logits + int8 {0,1} targets, partial last
    #    tile masked purely due to row partiality (no explicit zero padding).
    lg5 = lg4.astype(jnp.bfloat16)
    lb5 = lb4.astype(jnp.int8)
    out5 = jax.block_until_ready(focal_loss(lg5, lb5, block_rows=64))
    ref5 = focal_loss_ref(lg5.astype(jnp.float32), lb5.astype(jnp.float32))
    assert jnp.allclose(out5, ref5, rtol=1e-4, atol=1e-5), (out5, ref5)

    print("KERNEL_OK")
</pallas_src>

<mosaic_0001>
module attributes {stable_mosaic.version = 11 : i64} {
  func.func @focal_loss_kernel(%arg0: i32, %arg1: i32, %arg2: memref<40x128xf32, #tpu.memory_space<vmem>>, %arg3: memref<40x128xf32, #tpu.memory_space<vmem>>, %arg4: memref<8x128xf32, #tpu.memory_space<vmem>>) attributes {dimension_semantics = [#tpu.dimension_semantics<parallel>, #tpu.dimension_semantics<arbitrary>], iteration_bounds = array<i64: 1, 1>, scalar_prefetch = 0 : i64, scratch_operands = 0 : i64, tpu.core_type = #tpu.core_type<tc>, window_params = [{transform_indices = @transform_0, window_bounds = array<i64: 40, 128>}, {transform_indices = @transform_1, window_bounds = array<i64: 40, 128>}, {transform_indices = @transform_2, window_bounds = array<i64: 8, 128>}]} {
    %c1_i32 = arith.constant 1 : i32
    %0 = arith.muli %arg0, %c1_i32 : i32
    %1 = arith.addi %0, %arg1 : i32
    %c0_i32 = arith.constant 0 : i32
    %2 = arith.cmpi eq, %arg1, %c0_i32 : i32
    %3 = arith.extui %2 : i1 to i32
    %c0_i32_0 = arith.constant 0 : i32
    %4 = arith.cmpi ne, %3, %c0_i32_0 : i32
    scf.if %4 {
      %cst = arith.constant 0.000000e+00 : f32
      %11 = vector.broadcast %cst : f32 to vector<8x128xf32>
      %c0 = arith.constant 0 : index
      %c0_5 = arith.constant 0 : index
      %12 = vector.load %arg4[%c0, %c0_5] : memref<8x128xf32, #tpu.memory_space<vmem>>, vector<8x128xf32>
      tpu.vector_store %arg4[%c0, %c0_5], %11 {strides = array<i32>} : memref<8x128xf32, #tpu.memory_space<vmem>>, vector<8x128xf32>,
    } else {
    }
    %c0_i32_1 = arith.constant 0 : i32
    %5 = arith.cmpi slt, %1, %c0_i32_1 : i32
    %6 = arith.extui %5 : i1 to i32
    %c0_i32_2 = arith.constant 0 : i32
    %7 = arith.cmpi ne, %6, %c0_i32_2 : i32
    scf.if %7 {
      %c0 = arith.constant 0 : index
      %c0_5 = arith.constant 0 : index
      %11 = vector.load %arg2[%c0, %c0_5] : memref<40x128xf32, #tpu.memory_space<vmem>>, vector<40x128xf32>
      %c0_6 = arith.constant 0 : index
      %c0_7 = arith.constant 0 : index
      %12 = vector.load %arg3[%c0_6, %c0_7] : memref<40x128xf32, #tpu.memory_space<vmem>>, vector<40x128xf32>
      %cst = arith.constant 2.000000e+00 : f32
      %13 = vector.broadcast %cst : f32 to vector<40x128xf32>
      %14 = arith.mulf %13, %12 : vector<40x128xf32>
      %cst_8 = arith.constant 1.000000e+00 : f32
      %15 = vector.broadcast %cst_8 : f32 to vector<40x128xf32>
      %16 = arith.subf %15, %14 : vector<40x128xf32>
      %17 = arith.mulf %11, %16 : vector<40x128xf32>
      %18 = math.absf %17 : vector<40x128xf32>
      %cst_9 = arith.constant 0.000000e+00 : f32
      %19 = vector.broadcast %cst_9 : f32 to vector<40x128xf32>
      %20 = arith.subf %19, %18 : vector<40x128xf32>
      %21 = math.exp %20 : vector<40x128xf32>
      %cst_10 = arith.constant 0.000000e+00 : f32
      %22 = vector.broadcast %cst_10 : f32 to vector<40x128xf32>
      %23 = arith.maximumf %17, %22 : vector<40x128xf32>
      %24 = math.log1p %21 : vector<40x128xf32>
      %25 = arith.addf %23, %24 : vector<40x128xf32>
      %cst_11 = arith.constant 1.000000e+00 : f32
      %26 = vector.broadcast %cst_11 : f32 to vector<40x128xf32>
      %27 = arith.addf %26, %21 : vector<40x128xf32>
      %28 = tpu.reciprocal %27 {approx = true} : vector<40x128xf32> -> vector<40x128xf32>
      %29 = arith.mulf %27, %28 : vector<40x128xf32>
      %cst_12 = arith.constant 2.000000e+00 : f32
      %30 = vector.broadcast %cst_12 : f32 to vector<40x128xf32>
      %31 = arith.subf %30, %29 : vector<40x128xf32>
      %32 = arith.mulf %28, %31 : vector<40x128xf32>
      %cst_13 = arith.constant 0.000000e+00 : f32
      %33 = vector.broadcast %cst_13 : f32 to vector<40x128xf32>
      %34 = arith.cmpf oge, %17, %33 : vector<40x128xf32>
      %cst_14 = arith.constant 1.000000e+00 : f32
      %35 = vector.broadcast %cst_14 : f32 to vector<40x128xf32>
      %36 = arith.select %34, %35, %21 : vector<40x128xi1>, vector<40x128xf32>
      %37 = arith.mulf %36, %32 : vector<40x128xf32>
      %cst_15 = arith.constant 0.000000e+00 : f32
      %38 = vector.broadcast %cst_15 : f32 to vector<40x128xf32>
      %39 = arith.mulf %38, %12 : vector<40x128xf32>
      %cst_16 = arith.constant 5.000000e-01 : f32
      %40 = vector.broadcast %cst_16 : f32 to vector<40x128xf32>
      %41 = arith.addf %40, %39 : vector<40x128xf32>
      %42 = arith.mulf %37, %37 : vector<40x128xf32>
      %43 = arith.mulf %41, %42 : vector<40x128xf32>
      %44 = arith.mulf %43, %25 : vector<40x128xf32>
      %c0_17 = arith.constant 0 : index
      %c0_18 = arith.constant 0 : index
      %45 = vector.load %arg4[%c0_17, %c0_18] : memref<8x128xf32, #tpu.memory_space<vmem>>, vector<8x128xf32>
      %46 = vector.shape_cast %44 : vector<40x128xf32> to vector<5x8x128xf32>
      %cst_19 = arith.constant dense<0.000000e+00> : vector<8x128xf32>
      %47 = vector.multi_reduction <add>, %46, %cst_19 [0] : vector<5x8x128xf32> to vector<8x128xf32>
      %48 = arith.addf %45, %47 : vector<8x128xf32>
      %c0_20 = arith.constant 0 : index
      %c0_21 = arith.constant 0 : index
      %49 = vector.load %arg4[%c0_20, %c0_21] : memref<8x128xf32, #tpu.memory_space<vmem>>, vector<8x128xf32>
      tpu.vector_store %arg4[%c0_20, %c0_21], %48 {strides = array<i32>} : memref<8x128xf32, #tpu.memory_space<vmem>>, vector<8x128xf32>,
    } else {
    }
    %c0_i32_3 = arith.constant 0 : i32
    %8 = arith.cmpi eq, %1, %c0_i32_3 : i32
    %9 = arith.extui %8 : i1 to i32
    %c0_i32_4 = arith.constant 0 : i32
    %10 = arith.cmpi ne, %9, %c0_i32_4 : i32
    scf.if %10 {
      %11 = tpu.iota {dimensions = array<i32: 0>} : vector<40x128xi32>
      %12 = tpu.iota {dimensions = array<i32: 1>} : vector<40x128xi32>
      %c128_i32 = arith.constant 128 : i32
      %13 = vector.broadcast %c128_i32 : i32 to vector<40x128xi32>
      %14 = arith.muli %11, %13 : vector<40x128xi32>
      %15 = arith.addi %14, %12 : vector<40x128xi32>
      %c5000_i32 = arith.constant 5000 : i32
      %16 = vector.broadcast %c5000_i32 : i32 to vector<40x128xi32>
      %17 = arith.cmpi slt, %15, %16 : vector<40x128xi32>
      %c0 = arith.constant 0 : index
      %c0_5 = arith.constant 0 : index
      %18 = vector.load %arg2[%c0, %c0_5] : memref<40x128xf32, #tpu.memory_space<vmem>>, vector<40x128xf32>
      %c0_6 = arith.constant 0 : index
      %c0_7 = arith.constant 0 : index
      %19 = vector.load %arg3[%c0_6, %c0_7] : memref<40x128xf32, #tpu.memory_space<vmem>>, vector<40x128xf32>
      %cst = arith.constant 0.000000e+00 : f32
      %20 = vector.broadcast %cst : f32 to vector<40x128xf32>
      %21 = arith.select %17, %18, %20 : vector<40x128xi1>, vector<40x128xf32>
      %cst_8 = arith.constant 0.000000e+00 : f32
      %22 = vector.broadcast %cst_8 : f32 to vector<40x128xf32>
      %23 = arith.select %17, %19, %22 : vector<40x128xi1>, vector<40x128xf32>
      %cst_9 = arith.constant 2.000000e+00 : f32
      %24 = vector.broadcast %cst_9 : f32 to vector<40x128xf32>
      %25 = arith.mulf %24, %23 : vector<40x128xf32>
      %cst_10 = arith.constant 1.000000e+00 : f32
      %26 = vector.broadcast %cst_10 : f32 to vector<40x128xf32>
      %27 = arith.subf %26, %25 : vector<40x128xf32>
      %28 = arith.mulf %21, %27 : vector<40x128xf32>
      %29 = math.absf %28 : vector<40x128xf32>
      %cst_11 = arith.constant 0.000000e+00 : f32
      %30 = vector.broadcast %cst_11 : f32 to vector<40x128xf32>
      %31 = arith.subf %30, %29 : vector<40x128xf32>
      %32 = math.exp %31 : vector<40x128xf32>
      %cst_12 = arith.constant 0.000000e+00 : f32
      %33 = vector.broadcast %cst_12 : f32 to vector<40x128xf32>
      %34 = arith.maximumf %28, %33 : vector<40x128xf32>
      %35 = math.log1p %32 : vector<40x128xf32>
      %36 = arith.addf %34, %35 : vector<40x128xf32>
      %cst_13 = arith.constant 1.000000e+00 : f32
      %37 = vector.broadcast %cst_13 : f32 to vector<40x128xf32>
      %38 = arith.addf %37, %32 : vector<40x128xf32>
      %39 = tpu.reciprocal %38 {approx = true} : vector<40x128xf32> -> vector<40x128xf32>
      %40 = arith.mulf %38, %39 : vector<40x128xf32>
      %cst_14 = arith.constant 2.000000e+00 : f32
      %41 = vector.broadcast %cst_14 : f32 to vector<40x128xf32>
      %42 = arith.subf %41, %40 : vector<40x128xf32>
      %43 = arith.mulf %39, %42 : vector<40x128xf32>
      %cst_15 = arith.constant 0.000000e+00 : f32
      %44 = vector.broadcast %cst_15 : f32 to vector<40x128xf32>
      %45 = arith.cmpf oge, %28, %44 : vector<40x128xf32>
      %cst_16 = arith.constant 1.000000e+00 : f32
      %46 = vector.broadcast %cst_16 : f32 to vector<40x128xf32>
      %47 = arith.select %45, %46, %32 : vector<40x128xi1>, vector<40x128xf32>
      %48 = arith.mulf %47, %43 : vector<40x128xf32>
      %cst_17 = arith.constant 0.000000e+00 : f32
      %49 = vector.broadcast %cst_17 : f32 to vector<40x128xf32>
      %50 = arith.mulf %49, %23 : vector<40x128xf32>
      %cst_18 = arith.constant 5.000000e-01 : f32
      %51 = vector.broadcast %cst_18 : f32 to vector<40x128xf32>
      %52 = arith.addf %51, %50 : vector<40x128xf32>
      %53 = arith.mulf %48, %48 : vector<40x128xf32>
      %54 = arith.mulf %52, %53 : vector<40x128xf32>
      %55 = arith.mulf %54, %36 : vector<40x128xf32>
      %cst_19 = arith.constant 0.000000e+00 : f32
      %56 = vector.broadcast %cst_19 : f32 to vector<40x128xf32>
      %57 = arith.select %17, %55, %56 : vector<40x128xi1>, vector<40x128xf32>
      %c0_20 = arith.constant 0 : index
      %c0_21 = arith.constant 0 : index
      %58 = vector.load %arg4[%c0_20, %c0_21] : memref<8x128xf32, #tpu.memory_space<vmem>>, vector<8x128xf32>
      %59 = vector.shape_cast %57 : vector<40x128xf32> to vector<5x8x128xf32>
      %cst_22 = arith.constant dense<0.000000e+00> : vector<8x128xf32>
      %60 = vector.multi_reduction <add>, %59, %cst_22 [0] : vector<5x8x128xf32> to vector<8x128xf32>
      %61 = arith.addf %58, %60 : vector<8x128xf32>
      %c0_23 = arith.constant 0 : index
      %c0_24 = arith.constant 0 : index
      %62 = vector.load %arg4[%c0_23, %c0_24] : memref<8x128xf32, #tpu.memory_space<vmem>>, vector<8x128xf32>
      tpu.vector_store %arg4[%c0_23, %c0_24], %61 {strides = array<i32>} : memref<8x128xf32, #tpu.memory_space<vmem>>, vector<8x128xf32>,
    } else {
    }
    return
  }
  func.func @transform_0(%arg0: i32, %arg1: i32) -> (i32, i32) {
    %c1_i32 = arith.constant 1 : i32
    %0 = arith.muli %arg0, %c1_i32 : i32
    %1 = arith.addi %0, %arg1 : i32
    %c0_i32 = arith.constant 0 : i32
    %c0_i32_0 = arith.constant 0 : i32
    return %1, %c0_i32 : i32, i32
  }
  func.func @transform_1(%arg0: i32, %arg1: i32) -> (i32, i32) {
    %c1_i32 = arith.constant 1 : i32
    %0 = arith.muli %arg0, %c1_i32 : i32
    %1 = arith.addi %0, %arg1 : i32
    %c0_i32 = arith.constant 0 : i32
    %c0_i32_0 = arith.constant 0 : i32
    return %1, %c0_i32 : i32, i32
  }
  func.func @transform_2(%arg0: i32, %arg1: i32) -> (i32, i32) {
    %c0_i32 = arith.constant 0 : i32
    %c0_i32_0 = arith.constant 0 : i32
    return %arg0, %c0_i32 : i32, i32
  }
}

</mosaic_0001>

<llo_original>
// kernel: tpu_custom_call.1
$region0: #{tpu_custom_call.1}
  #allocation0 [shape = 'u32[]', space=smem, size = 0x4, offset = 0x4, fixed_abs, tag = 'smem constant byte address 0x4 - core index']
  #allocation1 [shape = 'u32[72,128]{1,0:T(1,128)}', space=vmem, size = 0x9000, scoped, tag = 'internal scratch']
  %s0 = inlined_call_operand.hbm [shape: f32[40,128], index: 0, kind: input, shape index: {}]
  %s1 = inlined_call_operand.hbm [shape: f32[40,128], index: 1, kind: input, shape index: {}]
  %s2 = inlined_call_operand.hbm [shape: f32[8,128], index: 2, kind: output, shape index: {}]
  %s3 = sld [smem:[#allocation0]]
  $region38: #{tpu_custom_call.1} parent=0
    _
  %s5 = ssub.s32 1, %s3
  %s6 = scalar_select 0, %s5, %s3
  $region1: #{tpu_custom_call.1} parent=0
    #allocation2 [shape = 'u8[20480]{0}', space=vmem, size = 0x5000, scoped, tag = 'input window, operand 0, single buffered']
    #allocation3 [shape = 's32[1]{0}', space=sflag, size = 0x4, scoped, tag = 'scoped memory for tpu_custom_call.1']
    #allocation4 [shape = 's32[1]{0}', space=sflag, size = 0x4, scoped, tag = 'scoped memory for tpu_custom_call.1']
    #allocation5 [shape = 'u8[20480]{0}', space=vmem, size = 0x5000, scoped, tag = 'input window, operand 1, single buffered']
    #allocation6 [shape = 's32[1]{0}', space=sflag, size = 0x4, scoped, tag = 'scoped memory for tpu_custom_call.1']
    #allocation7 [shape = 'u8[4096]{0}', space=vmem, size = 0x1000, scoped, tag = 'output window, operand 0, single buffered']
    %7 = vsyncpa [#allocation3], 0
    %8 = vsyncpa [#allocation6], 0
    %9 = vsyncpa [#allocation4], 0
    // Predicated region
    $region2: #{tpu_custom_call.1} parent=1 // pred_check
      _
    $region3: #{tpu_custom_call.1} parent=1 // pred_check_branch
      %11 = sbr.rel (0) target = $region5
    $region4: #{tpu_custom_call.1} parent=1 // pred_region
      %s12 = sadd.s32 0, 0
      %s13 = smul.u32 5, %s12
      %15 = vsyncadd [#allocation3], 0
      %s16 = smul.addr %s13, 8
      %s17 = scalar_lea.hbm %s0, %s16
      %s18 = sshll.u32 %s17, 4
      %s19 = int_to_ptr.hbm [resolvable:$true] %s18
      %s20 = sshll.u32 [#allocation2], 4
      %s21 = int_to_ptr.vmem [resolvable:$true] %s20
      %26 = dma.hbm_to_vmem [thread:$0]  %s19, 640, %s21, [#allocation3], 128, 128, 8
    $region5: #{tpu_custom_call.1} parent=1 // pred_fallthru
      _
    // Predicated region
    $region6: #{tpu_custom_call.1} parent=1 // pred_check
      _
    $region7: #{tpu_custom_call.1} parent=1 // pred_check_branch
      %28 = sbr.rel (0) target = $region9
    $region8: #{tpu_custom_call.1} parent=1 // pred_region
      %s29 = sadd.s32 0, 0
      %s30 = smul.u32 5, %s29
      %32 = vsyncadd [#allocation6], 0
      %s33 = smul.addr %s30, 8
      %s34 = scalar_lea.hbm %s1, %s33
      %s35 = sshll.u32 %s34, 4
      %s36 = int_to_ptr.hbm [resolvable:$true] %s35
      %s37 = sshll.u32 [#allocation5], 4
      %s38 = int_to_ptr.vmem [resolvable:$true] %s37
      %43 = dma.hbm_to_vmem [thread:$0]  %s36, 640, %s38, [#allocation6], 128, 128, 8
    $region9: #{tpu_custom_call.1} parent=1 // pred_fallthru
      _
    // Predicated region
    $region10: #{tpu_custom_call.1} parent=1 // pred_check
      _
    $region11: #{tpu_custom_call.1} parent=1 // pred_check_branch
      %45 = sbr.rel (0) target = $region13
    $region12: #{tpu_custom_call.1} parent=1 // pred_region
      %47 = dma.done [#allocation3], 640
    $region13: #{tpu_custom_call.1} parent=1 // pred_fallthru
      _
    // Predicated region
    $region14: #{tpu_custom_call.1} parent=1 // pred_check
      _
    $region15: #{tpu_custom_call.1} parent=1 // pred_check_branch
      %49 = sbr.rel (0) target = $region17
    $region16: #{tpu_custom_call.1} parent=1 // pred_region
      %51 = dma.done [#allocation6], 640
    $region17: #{tpu_custom_call.1} parent=1 // pred_fallthru
      _
    %s52 = sadd.s32 0, 0
    %s53 = smul.u32 5, %s52
    %s54 = sadd.s32 0, 0
    %s55 = smul.u32 5, %s54
    %s56 = sadd.s32 0, 0
    %p57 = scmp.eq.s32.totalorder 0, 0
    // Predicated region
    $region18: #{tpu_custom_call.1} parent=1 // pred_check
      %p58 = pneg %p57
    $region19: #{tpu_custom_call.1} parent=1 // pred_check_branch
      %60 = sbr.rel (%p58) target = $region21
    $region20: #{tpu_custom_call.1} parent=1 // pred_region
      %61 = vst [vmem:[#allocation7] sm:$0xff] 0.0
    $region21: #{tpu_custom_call.1} parent=1 // pred_fallthru
      _
    %p62 = scmp.lt.s32.totalorder %s56, 0
    // Predicated region
    $region22: #{tpu_custom_call.1} parent=1 // pred_check
      %p63 = pneg %p62
    $region23: #{tpu_custom_call.1} parent=1 // pred_check_branch
      %65 = sbr.rel (%p63) target = $region25
    $region24: #{tpu_custom_call.1} parent=1 // pred_region
      %v66 = vld [vmem:[#allocation2] sm:$0xff]
      %v67 = vld [vmem:[#allocation2 + $0x8] sm:$0xff]
      %v68 = vld [vmem:[#allocation2 + $0x10] sm:$0xff]
      %v69 = vld [vmem:[#allocation2 + $0x18] sm:$0xff]
      %v70 = vld [vmem:[#allocation2 + $0x20] sm:$0xff]
      %v71 = vld [vmem:[#allocation5] sm:$0xff]
      %v72 = vld [vmem:[#allocation5 + $0x8] sm:$0xff]
      %v73 = vld [vmem:[#allocation5 + $0x10] sm:$0xff]
      %v74 = vld [vmem:[#allocation5 + $0x18] sm:$0xff]
      %v75 = vld [vmem:[#allocation5 + $0x20] sm:$0xff]
      %v76 = vmul.f32 %v71, 2.0
      %v77 = vmul.f32 %v72, 2.0
      %v78 = vmul.f32 %v73, 2.0
      %v79 = vmul.f32 %v74, 2.0
      %v80 = vmul.f32 %v75, 2.0
      %v81 = vsub.f32 1.0, %v76
      %v82 = vsub.f32 1.0, %v77
      %v83 = vsub.f32 1.0, %v78
      %v84 = vsub.f32 1.0, %v79
      %v85 = vsub.f32 1.0, %v80
      %v86 = vmul.f32 %v66, %v81
      %v87 = vmul.f32 %v67, %v82
      %v88 = vmul.f32 %v68, %v83
      %v89 = vmul.f32 %v69, %v84
      %v90 = vmul.f32 %v70, %v85
      %v91 = vand.u32 2147483647, %v86
      %v92 = vand.u32 2147483647, %v87
      %v93 = vand.u32 2147483647, %v88
      %v94 = vand.u32 2147483647, %v89
      %v95 = vand.u32 2147483647, %v90
      %v96 = vsub.f32 0.0, %v91
      %v97 = vsub.f32 0.0, %v92
      %v98 = vsub.f32 0.0, %v93
      %v99 = vsub.f32 0.0, %v94
      %v100 = vsub.f32 0.0, %v95
      %v101 = vmul.f32 %v96, 1.442695
      %v102 = vpow.pop %v101
      %v103 = vmul.f32 %v97, 1.442695
      %v104 = vpow.pop %v103
      %v105 = vmul.f32 %v98, 1.442695
      %v106 = vpow.pop %v105
      %v107 = vmul.f32 %v99, 1.442695
      %v108 = vpow.pop %v107
      %v109 = vmul.f32 %v100, 1.442695
      %v110 = vpow.pop %v109
      %v111 = vmax.f32 %v86, 0.0
      %v112 = vmax.f32 %v87, 0.0
      %v113 = vmax.f32 %v88, 0.0
      %v114 = vmax.f32 %v89, 0.0
      %v115 = vmax.f32 %v90, 0.0
      %v116 = vadd.f32 %v102, 1.0
      %v117 = vlog2.pop %v116
      %v118 = vmul.f32 %v117, 0.6931472
      %v119 = vmul.f32 -0.5, %v102
      %v120 = vadd.f32 %v119, 1.0
      %v121 = vmul.f32 %v120, %v102
      %v122 = vand.u32 2147483647, %v102
      %vm123 = vcmp.lt.f32.partialorder %v122, 0.0004427343
      %v124 = vsel %vm123, %v121, %v118
      %v125 = vadd.f32 %v104, 1.0
      %v126 = vlog2.pop %v125
      %v127 = vmul.f32 %v126, 0.6931472
      %v128 = vmul.f32 -0.5, %v104
      %v129 = vadd.f32 %v128, 1.0
      %v130 = vmul.f32 %v129, %v104
      %v131 = vand.u32 2147483647, %v104
      %vm132 = vcmp.lt.f32.partialorder %v131, 0.0004427343
      %v133 = vsel %vm132, %v130, %v127
      %v134 = vadd.f32 %v106, 1.0
      %v135 = vlog2.pop %v134
      %v136 = vmul.f32 %v135, 0.6931472
      %v137 = vmul.f32 -0.5, %v106
      %v138 = vadd.f32 %v137, 1.0
      %v139 = vmul.f32 %v138, %v106
      %v140 = vand.u32 2147483647, %v106
      %vm141 = vcmp.lt.f32.partialorder %v140, 0.0004427343
      %v142 = vsel %vm141, %v139, %v136
      %v143 = vadd.f32 %v108, 1.0
      %v144 = vlog2.pop %v143
      %v145 = vmul.f32 %v144, 0.6931472
      %v146 = vmul.f32 -0.5, %v108
      %v147 = vadd.f32 %v146, 1.0
      %v148 = vmul.f32 %v147, %v108
      %v149 = vand.u32 2147483647, %v108
      %vm150 = vcmp.lt.f32.partialorder %v149, 0.0004427343
      %v151 = vsel %vm150, %v148, %v145
      %v152 = vadd.f32 %v110, 1.0
      %v153 = vlog2.pop %v152
      %v154 = vmul.f32 %v153, 0.6931472
      %v155 = vmul.f32 -0.5, %v110
      %v156 = vadd.f32 %v155, 1.0
      %v157 = vmul.f32 %v156, %v110
      %v158 = vand.u32 2147483647, %v110
      %vm159 = vcmp.lt.f32.partialorder %v158, 0.0004427343
      %v160 = vsel %vm159, %v157, %v154
      %v161 = vadd.f32 %v111, %v124
      %v162 = vadd.f32 %v112, %v133
      %v163 = vadd.f32 %v113, %v142
      %v164 = vadd.f32 %v114, %v151
      %v165 = vadd.f32 %v115, %v160
      %v166 = vadd.f32 %v102, 1.0
      %v167 = vadd.f32 %v104, 1.0
      %v168 = vadd.f32 %v106, 1.0
      %v169 = vadd.f32 %v108, 1.0
      %v170 = vadd.f32 %v110, 1.0
      %v171 = vrcp.pop %v166
      %v172 = vrcp.pop %v167
      %v173 = vrcp.pop %v168
      %v174 = vrcp.pop %v169
      %v175 = vrcp.pop %v170
      %v176 = vmul.f32 %v166, %v171
      %v177 = vmul.f32 %v167, %v172
      %v178 = vmul.f32 %v168, %v173
      %v179 = vmul.f32 %v169, %v174
      %v180 = vmul.f32 %v170, %v175
      %v181 = vsub.f32 2.0, %v176
      %v182 = vsub.f32 2.0, %v177
      %v183 = vsub.f32 2.0, %v178
      %v184 = vsub.f32 2.0, %v179
      %v185 = vsub.f32 2.0, %v180
      %v186 = vmul.f32 %v171, %v181
      %v187 = vmul.f32 %v172, %v182
      %v188 = vmul.f32 %v173, %v183
      %v189 = vmul.f32 %v174, %v184
      %v190 = vmul.f32 %v175, %v185
      %vm191 = vcmp.ge.f32.partialorder %v86, 0.0
      %vm192 = vcmp.ge.f32.partialorder %v87, 0.0
      %vm193 = vcmp.ge.f32.partialorder %v88, 0.0
      %vm194 = vcmp.ge.f32.partialorder %v89, 0.0
      %vm195 = vcmp.ge.f32.partialorder %v90, 0.0
      %v196 = vsel %vm191, 1.0, %v102
      %v197 = vsel %vm192, 1.0, %v104
      %v198 = vsel %vm193, 1.0, %v106
      %v199 = vsel %vm194, 1.0, %v108
      %v200 = vsel %vm195, 1.0, %v110
      %v201 = vmul.f32 %v196, %v186
      %v202 = vmul.f32 %v197, %v187
      %v203 = vmul.f32 %v198, %v188
      %v204 = vmul.f32 %v199, %v189
      %v205 = vmul.f32 %v200, %v190
      %v206 = vmul.f32 %v71, 0.0
      %v207 = vmul.f32 %v72, 0.0
      %v208 = vmul.f32 %v73, 0.0
      %v209 = vmul.f32 %v74, 0.0
      %v210 = vmul.f32 %v75, 0.0
      %v211 = vadd.f32 %v206, 0.5
      %v212 = vadd.f32 %v207, 0.5
      %v213 = vadd.f32 %v208, 0.5
      %v214 = vadd.f32 %v209, 0.5
      %v215 = vadd.f32 %v210, 0.5
      %v216 = vmul.f32 %v201, %v201
      %v217 = vmul.f32 %v202, %v202
      %v218 = vmul.f32 %v203, %v203
      %v219 = vmul.f32 %v204, %v204
      %v220 = vmul.f32 %v205, %v205
      %v221 = vmul.f32 %v211, %v216
      %v222 = vmul.f32 %v212, %v217
      %v223 = vmul.f32 %v213, %v218
      %v224 = vmul.f32 %v214, %v219
      %v225 = vmul.f32 %v215, %v220
      %v226 = vmul.f32 %v221, %v161
      %v227 = vmul.f32 %v222, %v162
      %v228 = vmul.f32 %v223, %v163
      %v229 = vmul.f32 %v224, %v164
      %v230 = vmul.f32 %v225, %v165
      %v231 = vld [vmem:[#allocation7] sm:$0xff]
      %v232 = vadd.f32 %v226, %v227
      %v233 = vadd.f32 %v232, %v228
      %v234 = vadd.f32 %v233, %v229
      %v235 = vadd.f32 %v234, %v230
      %v236 = vadd.f32 %v231, %v235
      %237 = vst [vmem:[#allocation7] sm:$0xff] %v236
    $region25: #{tpu_custom_call.1} parent=1 // pred_fallthru
      _
    %p238 = scmp.eq.s32.totalorder %s56, 0
    // Predicated region
    $region26: #{tpu_custom_call.1} parent=1 // pred_check
      %p239 = pneg %p238
    $region27: #{tpu_custom_call.1} parent=1 // pred_check_branch
      %241 = sbr.rel (%p239) target = $region29
    $region28: #{tpu_custom_call.1} parent=1 // pred_region
      %v242 = vlaneseq
      %v243 = vshrl.u32 %v242, 7
      %v244 = vadd.s32 %v243, 8
      %v245 = vadd.s32 %v243, 16
      %v246 = vadd.s32 %v243, 24
      %v247 = vadd.s32 %v243, 32
      %v248 = vlaneseq
      %v249 = vand.u32 %v248, 127
      %v250 = vmul.u32 %v243, 128
      %v251 = vmul.u32 %v244, 128
      %v252 = vmul.u32 %v245, 128
      %v253 = vmul.u32 %v246, 128
      %v254 = vmul.u32 %v247, 128
      %v255 = vadd.s32 %v250, %v249
      %v256 = vadd.s32 %v251, %v249
      %v257 = vadd.s32 %v252, %v249
      %v258 = vadd.s32 %v253, %v249
      %v259 = vadd.s32 %v254, %v249
      %vm260 = vcmp.lt.s32.totalorder %v255, 5000
      %vm261 = vcmp.lt.s32.totalorder %v256, 5000
      %vm262 = vcmp.lt.s32.totalorder %v257, 5000
      %vm263 = vcmp.lt.s32.totalorder %v258, 5000
      %vm264 = vcmp.lt.s32.totalorder %v259, 5000
      %v265 = vld [vmem:[#allocation2] sm:$0xff]
      %v266 = vld [vmem:[#allocation2 + $0x8] sm:$0xff]
      %v267 = vld [vmem:[#allocation2 + $0x10] sm:$0xff]
      %v268 = vld [vmem:[#allocation2 + $0x18] sm:$0xff]
      %v269 = vld [vmem:[#allocation2 + $0x20] sm:$0xff]
      %v270 = vld [vmem:[#allocation5] sm:$0xff]
      %v271 = vld [vmem:[#allocation5 + $0x8] sm:$0xff]
      %v272 = vld [vmem:[#allocation5 + $0x10] sm:$0xff]
      %v273 = vld [vmem:[#allocation5 + $0x18] sm:$0xff]
      %v274 = vld [vmem:[#allocation5 + $0x20] sm:$0xff]
      %v275 = vsel %vm260, %v265, 0.0
      %v276 = vsel %vm261, %v266, 0.0
      %v277 = vsel %vm262, %v267, 0.0
      %v278 = vsel %vm263, %v268, 0.0
      %v279 = vsel %vm264, %v269, 0.0
      %v280 = vsel %vm260, %v270, 0.0
      %v281 = vsel %vm261, %v271, 0.0
      %v282 = vsel %vm262, %v272, 0.0
      %v283 = vsel %vm263, %v273, 0.0
      %v284 = vsel %vm264, %v274, 0.0
      %v285 = vmul.f32 %v280, 2.0
      %v286 = vmul.f32 %v281, 2.0
      %v287 = vmul.f32 %v282, 2.0
      %v288 = vmul.f32 %v283, 2.0
      %v289 = vmul.f32 %v284, 2.0
      %v290 = vsub.f32 1.0, %v285
      %v291 = vsub.f32 1.0, %v286
      %v292 = vsub.f32 1.0, %v287
      %v293 = vsub.f32 1.0, %v288
      %v294 = vsub.f32 1.0, %v289
      %v295 = vmul.f32 %v275, %v290
      %v296 = vmul.f32 %v276, %v291
      %v297 = vmul.f32 %v277, %v292
      %v298 = vmul.f32 %v278, %v293
      %v299 = vmul.f32 %v279, %v294
      %v300 = vand.u32 2147483647, %v295
      %v301 = vand.u32 2147483647, %v296
      %v302 = vand.u32 2147483647, %v297
      %v303 = vand.u32 2147483647, %v298
      %v304 = vand.u32 2147483647, %v299
      %v305 = vsub.f32 0.0, %v300
      %v306 = vsub.f32 0.0, %v301
      %v307 = vsub.f32 0.0, %v302
      %v308 = vsub.f32 0.0, %v303
      %v309 = vsub.f32 0.0, %v304
      %v310 = vmul.f32 %v305, 1.442695
      %v311 = vpow.pop %v310
      %v312 = vmul.f32 %v306, 1.442695
      %v313 = vpow.pop %v312
      %v314 = vmul.f32 %v307, 1.442695
      %v315 = vpow.pop %v314
      %v316 = vmul.f32 %v308, 1.442695
      %v317 = vpow.pop %v316
      %v318 = vmul.f32 %v309, 1.442695
      %v319 = vpow.pop %v318
      %v320 = vmax.f32 %v295, 0.0
      %v321 = vmax.f32 %v296, 0.0
      %v322 = vmax.f32 %v297, 0.0
      %v323 = vmax.f32 %v298, 0.0
      %v324 = vmax.f32 %v299, 0.0
      %v325 = vadd.f32 %v311, 1.0
      %v326 = vlog2.pop %v325
      %v327 = vmul.f32 %v326, 0.6931472
      %v328 = vmul.f32 -0.5, %v311
      %v329 = vadd.f32 %v328, 1.0
      %v330 = vmul.f32 %v329, %v311
      %v331 = vand.u32 2147483647, %v311
      %vm332 = vcmp.lt.f32.partialorder %v331, 0.0004427343
      %v333 = vsel %vm332, %v330, %v327
      %v334 = vadd.f32 %v313, 1.0
      %v335 = vlog2.pop %v334
      %v336 = vmul.f32 %v335, 0.6931472
      %v337 = vmul.f32 -0.5, %v313
      %v338 = vadd.f32 %v337, 1.0
      %v339 = vmul.f32 %v338, %v313
      %v340 = vand.u32 2147483647, %v313
      %vm341 = vcmp.lt.f32.partialorder %v340, 0.0004427343
      %v342 = vsel %vm341, %v339, %v336
      %v343 = vadd.f32 %v315, 1.0
      %v344 = vlog2.pop %v343
      %v345 = vmul.f32 %v344, 0.6931472
      %v346 = vmul.f32 -0.5, %v315
      %v347 = vadd.f32 %v346, 1.0
      %v348 = vmul.f32 %v347, %v315
      %v349 = vand.u32 2147483647, %v315
      %vm350 = vcmp.lt.f32.partialorder %v349, 0.0004427343
      %v351 = vsel %vm350, %v348, %v345
      %v352 = vadd.f32 %v317, 1.0
      %v353 = vlog2.pop %v352
      %v354 = vmul.f32 %v353, 0.6931472
      %v355 = vmul.f32 -0.5, %v317
      %v356 = vadd.f32 %v355, 1.0
      %v357 = vmul.f32 %v356, %v317
      %v358 = vand.u32 2147483647, %v317
      %vm359 = vcmp.lt.f32.partialorder %v358, 0.0004427343
      %v360 = vsel %vm359, %v357, %v354
      %v361 = vadd.f32 %v319, 1.0
      %v362 = vlog2.pop %v361
      %v363 = vmul.f32 %v362, 0.6931472
      %v364 = vmul.f32 -0.5, %v319
      %v365 = vadd.f32 %v364, 1.0
      %v366 = vmul.f32 %v365, %v319
      %v367 = vand.u32 2147483647, %v319
      %vm368 = vcmp.lt.f32.partialorder %v367, 0.0004427343
      %v369 = vsel %vm368, %v366, %v363
      %v370 = vadd.f32 %v320, %v333
      %v371 = vadd.f32 %v321, %v342
      %v372 = vadd.f32 %v322, %v351
      %v373 = vadd.f32 %v323, %v360
      %v374 = vadd.f32 %v324, %v369
      %v375 = vadd.f32 %v311, 1.0
      %v376 = vadd.f32 %v313, 1.0
      %v377 = vadd.f32 %v315, 1.0
      %v378 = vadd.f32 %v317, 1.0
      %v379 = vadd.f32 %v319, 1.0
      %v380 = vrcp.pop %v375
      %v381 = vrcp.pop %v376
      %v382 = vrcp.pop %v377
      %v383 = vrcp.pop %v378
      %v384 = vrcp.pop %v379
      %v385 = vmul.f32 %v375, %v380
      %v386 = vmul.f32 %v376, %v381
      %v387 = vmul.f32 %v377, %v382
      %v388 = vmul.f32 %v378, %v383
      %v389 = vmul.f32 %v379, %v384
      %v390 = vsub.f32 2.0, %v385
      %v391 = vsub.f32 2.0, %v386
      %v392 = vsub.f32 2.0, %v387
      %v393 = vsub.f32 2.0, %v388
      %v394 = vsub.f32 2.0, %v389
      %v395 = vmul.f32 %v380, %v390
      %v396 = vmul.f32 %v381, %v391
      %v397 = vmul.f32 %v382, %v392
      %v398 = vmul.f32 %v383, %v393
      %v399 = vmul.f32 %v384, %v394
      %vm400 = vcmp.ge.f32.partialorder %v295, 0.0
      %vm401 = vcmp.ge.f32.partialorder %v296, 0.0
      %vm402 = vcmp.ge.f32.partialorder %v297, 0.0
      %vm403 = vcmp.ge.f32.partialorder %v298, 0.0
      %vm404 = vcmp.ge.f32.partialorder %v299, 0.0
      %v405 = vsel %vm400, 1.0, %v311
      %v406 = vsel %vm401, 1.0, %v313
      %v407 = vsel %vm402, 1.0, %v315
      %v408 = vsel %vm403, 1.0, %v317
      %v409 = vsel %vm404, 1.0, %v319
      %v410 = vmul.f32 %v405, %v395
      %v411 = vmul.f32 %v406, %v396
      %v412 = vmul.f32 %v407, %v397
      %v413 = vmul.f32 %v408, %v398
      %v414 = vmul.f32 %v409, %v399
      %v415 = vmul.f32 %v280, 0.0
      %v416 = vmul.f32 %v281, 0.0
      %v417 = vmul.f32 %v282, 0.0
      %v418 = vmul.f32 %v283, 0.0
      %v419 = vmul.f32 %v284, 0.0
      %v420 = vadd.f32 %v415, 0.5
      %v421 = vadd.f32 %v416, 0.5
      %v422 = vadd.f32 %v417, 0.5
      %v423 = vadd.f32 %v418, 0.5
      %v424 = vadd.f32 %v419, 0.5
      %v425 = vmul.f32 %v410, %v410
      %v426 = vmul.f32 %v411, %v411
      %v427 = vmul.f32 %v412, %v412
      %v428 = vmul.f32 %v413, %v413
      %v429 = vmul.f32 %v414, %v414
      %v430 = vmul.f32 %v420, %v425
      %v431 = vmul.f32 %v421, %v426
      %v432 = vmul.f32 %v422, %v427
      %v433 = vmul.f32 %v423, %v428
      %v434 = vmul.f32 %v424, %v429
      %v435 = vmul.f32 %v430, %v370
      %v436 = vmul.f32 %v431, %v371
      %v437 = vmul.f32 %v432, %v372
      %v438 = vmul.f32 %v433, %v373
      %v439 = vmul.f32 %v434, %v374
      %v440 = vsel %vm260, %v435, 0.0
      %v441 = vsel %vm261, %v436, 0.0
      %v442 = vsel %vm262, %v437, 0.0
      %v443 = vsel %vm263, %v438, 0.0
      %v444 = vsel %vm264, %v439, 0.0
      %v445 = vld [vmem:[#allocation7] sm:$0xff]
      %v446 = vadd.f32 %v440, %v441
      %v447 = vadd.f32 %v446, %v442
      %v448 = vadd.f32 %v447, %v443
      %v449 = vadd.f32 %v448, %v444
      %v450 = vadd.f32 %v445, %v449
      %451 = vst [vmem:[#allocation7] sm:$0xff] %v450
    $region29: #{tpu_custom_call.1} parent=1 // pred_fallthru
      _
    // Predicated region
    $region30: #{tpu_custom_call.1} parent=1 // pred_check
      _
    $region31: #{tpu_custom_call.1} parent=1 // pred_check_branch
      %453 = sbr.rel (0) target = $region33
    $region32: #{tpu_custom_call.1} parent=1 // pred_region
      %455 = vsyncadd [#allocation4], 0
      %s457 = sshll.u32 [#allocation7], 4
      %s458 = int_to_ptr.vmem [resolvable:$true] %s457
      %s459 = sshll.u32 %s2, 4
      %s460 = int_to_ptr.hbm [resolvable:$true] %s459
      %462 = dma.vmem_to_hbm [thread:$0]  %s458, 128, %s460, [#allocation4]
    $region33: #{tpu_custom_call.1} parent=1 // pred_fallthru
      _
    // Predicated region
    $region34: #{tpu_custom_call.1} parent=1 // pred_check
      _
    $region35: #{tpu_custom_call.1} parent=1 // pred_check_branch
      %464 = sbr.rel (0) target = $region37
    $region36: #{tpu_custom_call.1} parent=1 // pred_region
      %466 = dma.done [#allocation4], 128
    $region37: #{tpu_custom_call.1} parent=1 // pred_fallthru
      _
    %467 = vsyncpa [#allocation3], 1
    %468 = vsyncpa [#allocation6], 1
    %469 = vsyncpa [#allocation4], 1

</llo_original>
